<compile_context>
chip_gen: v7x
topology: tpu7x:2x2x1
jax: 0.10.0
libtpu: 0.0.40
codegen_flags: <defaults>
</compile_context>

<pallas_src>
import jax
import jax.numpy as jnp
from jax.experimental import pallas as pl
from jax.experimental.pallas import tpu as pltpu


# ----------------------------------------------------------------------------
# Kernels
# ----------------------------------------------------------------------------
def _pff_fused_kernel(x_ref, w_ref, b_ref, o_ref):
    """out_tile = x_tile @ W_fused + b_fused (bf16 MXU operands, f32 acc)."""
    x = x_ref[...]
    if x.dtype != jnp.bfloat16:           # static dtype check (trace time)
        x = x.astype(jnp.bfloat16)
    out = jnp.dot(x, w_ref[...], preferred_element_type=jnp.float32)
    out = out + b_ref[...]                 # (1, d_model) broadcasts in f32
    o_ref[...] = out.astype(o_ref.dtype)


def _pff_streamed_kernel(x_ref, w1_ref, w2_ref, b_ref, o_ref, acc_ref):
    """Two matmuls with a d_ff reduction axis and an f32 accumulator (P3)."""
    k = pl.program_id(1)

    @pl.when(k == 0)
    def _():
        acc_ref[...] = jnp.zeros_like(acc_ref)

    x = x_ref[...]
    if x.dtype != jnp.bfloat16:
        x = x.astype(jnp.bfloat16)
    # hidden block: (tm, tff), f32 accumulate; b1 is folded into b_ref already.
    h = jnp.dot(x, w1_ref[...], preferred_element_type=jnp.float32)
    acc_ref[...] += jnp.dot(h.astype(jnp.bfloat16), w2_ref[...],
                            preferred_element_type=jnp.float32)

    @pl.when(k == pl.num_programs(1) - 1)
    def _():
        o_ref[...] = (acc_ref[...] + b_ref[...]).astype(o_ref.dtype)


# ----------------------------------------------------------------------------
# One-time parameter preparation (hoisted out of the hot path -- cache these)
# ----------------------------------------------------------------------------
def fuse_pff_params(w1, b1, w2, b2):
    """W_fused = W1 @ W2 (f32 compute -> bf16), b_fused = b1 @ W2 + b2 (f32)."""
    w1f = w1.astype(jnp.float32)
    w2f = w2.astype(jnp.float32)
    w_fused = jnp.dot(w1f, w2f, preferred_element_type=jnp.float32).astype(jnp.bfloat16)
    b_fused = (jnp.dot(b1.astype(jnp.float32).reshape(1, -1), w2f,
                       preferred_element_type=jnp.float32)
               + b2.astype(jnp.float32).reshape(1, -1))
    return w_fused, b_fused


def prepare_streamed_params(w1, b1, w2, b2):
    """bf16 weights + folded output bias b_out = b1 @ W2 + b2 (f32)."""
    b_out = (jnp.dot(b1.astype(jnp.float32).reshape(1, -1), w2.astype(jnp.float32),
                     preferred_element_type=jnp.float32)
             + b2.astype(jnp.float32).reshape(1, -1))
    return w1.astype(jnp.bfloat16), w2.astype(jnp.bfloat16), b_out


def _row_tile(M, tm):
    """Clamp the row tile to M and force sublane (x8) alignment."""
    tm = min(tm, M)
    if tm < M:
        tm = max(8, (tm // 8) * 8)
    return tm


def _clamp_vmem(est_bytes):
    # Floor at the common scoped default, cap below v7x's 64 MiB/TC physical.
    return min(max(int(1.5 * est_bytes), 32 << 20), 56 << 20)


# ----------------------------------------------------------------------------
# Hot-path wrappers (take pre-prepared params)
# ----------------------------------------------------------------------------
def pff_fused(x, w_fused, b_fused, *, tm=256, vmem_limit_bytes=None):
    """x: (B, K, d_model); w_fused: (d_model, d_model) bf16; b_fused: (1, d_model) f32."""
    B, K, d_model = x.shape
    M = B * K
    x2d = x.reshape(M, d_model)
    tm = _row_tile(M, tm)
    grid_m = pl.cdiv(M, tm)
    xb = jnp.dtype(x.dtype).itemsize

    if vmem_limit_bytes is None:
        est = (2 * tm * d_model * xb            # x tiles (double-buffered)
               + 2 * tm * d_model * xb          # out tiles
               + 2 * w_fused.size * 2           # resident bf16 weight (2 bufs)
               + 2 * b_fused.size * 4
               + 2 * tm * d_model * 4)          # f32 compute headroom
        vmem_limit_bytes = _clamp_vmem(est)

    cost = pl.CostEstimate(
        flops=2 * M * d_model * d_model,
        transcendentals=0,
        bytes_accessed=int(x2d.size * xb + w_fused.size * 2
                           + b_fused.size * 4 + M * d_model * xb))

    out2d = pl.pallas_call(
        _pff_fused_kernel,
        out_shape=jax.ShapeDtypeStruct((M, d_model), x.dtype),
        grid_spec=pltpu.PrefetchScalarGridSpec(
            num_scalar_prefetch=0,
            grid=(grid_m,),
            in_specs=[
                # x: tiled over rows, double-buffered by Pallas.
                pl.BlockSpec((tm, d_model), lambda i: (i, 0)),
                # Fused weight / bias: constant index => fetched once, resident.
                # (Tiny -- d_model^2 bf16 -- so no need for pl.Buffered(1).)
                pl.BlockSpec((d_model, d_model), lambda i: (0, 0)),
                pl.BlockSpec((1, d_model), lambda i: (0, 0)),
            ],
            out_specs=pl.BlockSpec((tm, d_model), lambda i: (i, 0)),
        ),
        compiler_params=pltpu.CompilerParams(
            dimension_semantics=("parallel",),
            vmem_limit_bytes=vmem_limit_bytes,
        ),
        cost_estimate=cost,
    )(x2d, w_fused, b_fused)
    return out2d.reshape(B, K, d_model)


def pff_streamed(x, w1_bf16, w2_bf16, b_out, *, tm=256, tff=None,
                 vmem_limit_bytes=None):
    """Two-matmul path: weights streamed over a d_ff reduction grid axis."""
    B, K, d_model = x.shape
    d_ff = w1_bf16.shape[1]
    M = B * K
    x2d = x.reshape(M, d_model)
    tm = _row_tile(M, tm)
    grid_m = pl.cdiv(M, tm)
    xb = jnp.dtype(x.dtype).itemsize

    if tff is None:
        tff = min(d_ff, 512)
    tff = min(tff, d_ff)
    if tff < d_ff:
        tff = max(128, (tff // 128) * 128)       # lane alignment on the W1 block
    assert d_ff % tff == 0, "d_ff must be divisible by the d_ff tile (reduction axis)"
    grid_k = d_ff // tff

    if vmem_limit_bytes is None:
        est = (2 * tm * d_model * xb             # x tiles
               + 2 * tm * d_model * xb           # out tiles
               + 2 * d_model * tff * 2           # W1 block (bf16, double-buffered)
               + 2 * tff * d_model * 2           # W2 block
               + 2 * d_model * 4                 # folded bias
               + tm * d_model * 4                # f32 accumulator scratch
               + tm * tff * 6)                   # f32 hidden + bf16 copy
        vmem_limit_bytes = _clamp_vmem(est)

    cost = pl.CostEstimate(
        flops=4 * M * d_model * d_ff,
        transcendentals=0,
        bytes_accessed=int(x2d.size * xb + w1_bf16.size * 2 + w2_bf16.size * 2
                           + b_out.size * 4 + M * d_model * xb))

    out2d = pl.pallas_call(
        _pff_streamed_kernel,
        out_shape=jax.ShapeDtypeStruct((M, d_model), x.dtype),
        grid_spec=pltpu.PrefetchScalarGridSpec(
            num_scalar_prefetch=0,
            grid=(grid_m, grid_k),
            in_specs=[
                pl.BlockSpec((tm, d_model), lambda i, k: (i, 0)),
                pl.BlockSpec((d_model, tff), lambda i, k: (0, k)),
                pl.BlockSpec((tff, d_model), lambda i, k: (k, 0)),
                pl.BlockSpec((1, d_model), lambda i, k: (0, 0)),
            ],
            out_specs=pl.BlockSpec((tm, d_model), lambda i, k: (i, 0)),
            scratch_shapes=[pltpu.VMEM((tm, d_model), jnp.float32)],
        ),
        compiler_params=pltpu.CompilerParams(
            dimension_semantics=("parallel", "arbitrary"),
            vmem_limit_bytes=vmem_limit_bytes,
        ),
        cost_estimate=cost,
    )(x2d, w1_bf16, w2_bf16, b_out)
    return out2d.reshape(B, K, d_model)


# ----------------------------------------------------------------------------
# Convenience wrapper matching the PyTorch module's forward(x)
# ----------------------------------------------------------------------------
def positionwise_feed_forward(x, w1, b1, w2, b2, *, fuse=True, tm=256, tff=None,
                              vmem_limit_bytes=None):
    """x: (B, K, d_model); w1: (d_model, d_ff); b1: (1, d_ff);
    w2: (d_ff, d_model); b2: (1, d_model).  Returns (B, K, d_model).

    NOTE: for repeated calls, prepare params once with fuse_pff_params /
    prepare_streamed_params and call pff_fused / pff_streamed directly so the
    per-call weight fusion / f32->bf16 casts are hoisted out of the hot path.
    """
    if fuse:
        w_f, b_f = fuse_pff_params(w1, b1, w2, b2)
        return pff_fused(x, w_f, b_f, tm=tm, vmem_limit_bytes=vmem_limit_bytes)
    w1b, w2b, b_out = prepare_streamed_params(w1, b1, w2, b2)
    return pff_streamed(x, w1b, w2b, b_out, tm=tm, tff=tff,
                        vmem_limit_bytes=vmem_limit_bytes)


def init_params(key, d_model, d_ff, dtype=jnp.float32):
    """Deterministic init mimicking nn.Linear's uniform(-1/sqrt(fan_in), +)."""
    k1, k2, k3, k4 = jax.random.split(key, 4)
    bound1 = 1.0 / (d_model ** 0.5)
    bound2 = 1.0 / (d_ff ** 0.5)
    # stored transposed: (in_features, out_features)
    w1 = jax.random.uniform(k1, (d_model, d_ff), dtype, -bound1, bound1)
    b1 = jax.random.uniform(k2, (1, d_ff), dtype, -bound1, bound1)
    w2 = jax.random.uniform(k3, (d_ff, d_model), dtype, -bound2, bound2)
    b2 = jax.random.uniform(k4, (1, d_model), dtype, -bound2, bound2)
    return w1, b1, w2, b2


if __name__ == "__main__":
    key = jax.random.PRNGKey(0)
    kx, kp = jax.random.split(key)

    # Small but representative: lane-dense d_model (multiple of 128), a
    # multi-tile row grid (M=128, tm=64) and a multi-block d_ff reduction
    # (d_ff=256, tff=128) so both paths are genuinely exercised.
    B, K, d_model, d_ff = 2, 64, 128, 256
    x = jax.random.normal(kx, (B, K, d_model), dtype=jnp.float32)
    w1, b1, w2, b2 = init_params(kp, d_model, d_ff)

    # Pure-f32 reference of the PyTorch forward: linear2(linear1(x)).
    x2d = x.reshape(-1, d_model)
    ref32 = ((x2d @ w1 + b1) @ w2 + b2).reshape(B, K, d_model)

    # --- fused single-matmul path (default) --------------------------------
    w_f, b_f = fuse_pff_params(w1, b1, w2, b2)       # cache these in real use
    out_fused = jax.block_until_ready(pff_fused(x, w_f, b_f, tm=64))
    assert out_fused.shape == (B, K, d_model)
    ref_fused = (jnp.dot(x2d.astype(jnp.bfloat16), w_f,
                         preferred_element_type=jnp.float32)
                 + b_f).reshape(B, K, d_model)
    assert jnp.allclose(out_fused, ref_fused, atol=5e-3, rtol=5e-3)
    assert jnp.allclose(out_fused, ref32, atol=6e-2, rtol=6e-2)

    # --- streamed two-matmul path (d_ff reduction axis) ---------------------
    w1b, w2b, b_out = prepare_streamed_params(w1, b1, w2, b2)
    out_str = jax.block_until_ready(pff_streamed(x, w1b, w2b, b_out, tm=64, tff=128))
    assert out_str.shape == (B, K, d_model)
    h_ref = jnp.dot(x2d.astype(jnp.bfloat16), w1b,
                    preferred_element_type=jnp.float32).astype(jnp.bfloat16)
    ref_str = (jnp.dot(h_ref, w2b, preferred_element_type=jnp.float32)
               + b_out).reshape(B, K, d_model)
    assert jnp.allclose(out_str, ref_str, atol=5e-3, rtol=5e-3)
    assert jnp.allclose(out_str, ref32, atol=6e-2, rtol=6e-2)

    print("KERNEL_OK")
</pallas_src>

<mosaic_0001>
module attributes {stable_mosaic.version = 11 : i64} {
  func.func @_pff_fused_kernel(%arg0: i32, %arg1: memref<64x128xf32, #tpu.memory_space<vmem>>, %arg2: memref<128x128xbf16, #tpu.memory_space<vmem>>, %arg3: memref<1x128xf32, #tpu.memory_space<vmem>>, %arg4: memref<64x128xf32, #tpu.memory_space<vmem>>) attributes {dimension_semantics = [#tpu.dimension_semantics<parallel>], iteration_bounds = array<i64: 2>, scalar_prefetch = 0 : i64, scratch_operands = 0 : i64, tpu.core_type = #tpu.core_type<tc>, window_params = [{transform_indices = @transform_0, window_bounds = array<i64: 64, 128>}, {pipeline_mode = #tpu.pipeline_mode<synchronous>, transform_indices = @transform_1, window_bounds = array<i64: 128, 128>}, {pipeline_mode = #tpu.pipeline_mode<synchronous>, transform_indices = @transform_2, window_bounds = array<i64: 1, 128>}, {transform_indices = @transform_3, window_bounds = array<i64: 64, 128>}]} {
    %c0 = arith.constant 0 : index
    %c0_0 = arith.constant 0 : index
    %0 = vector.load %arg1[%c0, %c0_0] : memref<64x128xf32, #tpu.memory_space<vmem>>, vector<64x128xf32>
    %1 = arith.truncf %0 : vector<64x128xf32> to vector<64x128xbf16>
    %c0_1 = arith.constant 0 : index
    %c0_2 = arith.constant 0 : index
    %2 = vector.load %arg2[%c0_1, %c0_2] : memref<128x128xbf16, #tpu.memory_space<vmem>>, vector<128x128xbf16>
    %cst = arith.constant dense<0.000000e+00> : vector<64x128xf32>
    %3 = tpu.matmul %1, %2, %cst {dimension_numbers = #tpu.dot_dimension_numbers<[1], [0], [0], [1], [0, 0, 1, 1], [], []>} : vector<64x128xbf16>, vector<128x128xbf16>, vector<64x128xf32> -> vector<64x128xf32>
    %c0_3 = arith.constant 0 : index
    %c0_4 = arith.constant 0 : index
    %4 = vector.load %arg3[%c0_3, %c0_4] : memref<1x128xf32, #tpu.memory_space<vmem>>, vector<1x128xf32>
    %5 = vector.broadcast %4 : vector<1x128xf32> to vector<64x128xf32>
    %6 = arith.addf %3, %5 : vector<64x128xf32>
    %c0_5 = arith.constant 0 : index
    %c0_6 = arith.constant 0 : index
    %7 = vector.load %arg4[%c0_5, %c0_6] : memref<64x128xf32, #tpu.memory_space<vmem>>, vector<64x128xf32>
    tpu.vector_store %arg4[%c0_5, %c0_6], %6 {strides = array<i32>} : memref<64x128xf32, #tpu.memory_space<vmem>>, vector<64x128xf32>,
    return
  }
  func.func @transform_0(%arg0: i32) -> (i32, i32) {
    %c0_i32 = arith.constant 0 : i32
    %c0_i32_0 = arith.constant 0 : i32
    return %arg0, %c0_i32 : i32, i32
  }
  func.func @transform_1(%arg0: i32) -> (i32, i32) {
    %c0_i32 = arith.constant 0 : i32
    %c0_i32_0 = arith.constant 0 : i32
    %c0_i32_1 = arith.constant 0 : i32
    return %c0_i32, %c0_i32_0 : i32, i32
  }
  func.func @transform_2(%arg0: i32) -> (i32, i32) {
    %c0_i32 = arith.constant 0 : i32
    %c0_i32_0 = arith.constant 0 : i32
    %c0_i32_1 = arith.constant 0 : i32
    return %c0_i32, %c0_i32_0 : i32, i32
  }
  func.func @transform_3(%arg0: i32) -> (i32, i32) {
    %c0_i32 = arith.constant 0 : i32
    %c0_i32_0 = arith.constant 0 : i32
    return %arg0, %c0_i32 : i32, i32
  }
}

</mosaic_0001>

<llo_original>
// kernel: tpu_custom_call.1
$region0: #{tpu_custom_call.1}
  #allocation0 [shape = 'u32[]', space=smem, size = 0x4, offset = 0x4, fixed_abs, tag = 'smem constant byte address 0x4 - core index']
  #allocation1 [shape = 'u32[144,128]{1,0:T(1,128)}', space=vmem, size = 0x12000, scoped, tag = 'internal scratch']
  %s0 = inlined_call_operand.hbm [shape: f32[128,128], index: 0, kind: input, shape index: {}]
  %s1 = inlined_call_operand.hbm [shape: bf16[128,128], index: 1, kind: input, shape index: {}]
  %s2 = inlined_call_operand.vmem [shape: f32[1,128], index: 2, kind: input, shape index: {}]
  %s3 = inlined_call_operand.hbm [shape: f32[128,128], index: 3, kind: output, shape index: {}]
  %s4 = sld [smem:[#allocation0]]
  $region53: #{tpu_custom_call.1} parent=0
    _
  %s6 = ssub.s32 1, %s4
  %s7 = scalar_select 0, %s6, %s4
  $region1: #{tpu_custom_call.1} parent=0
    #allocation2 [shape = 'u8[65536]{0}', space=vmem, size = 0x10000, scoped, tag = 'input window, operand 0']
    #allocation3 [shape = 's32[2]{0}', space=sflag, size = 0x8, scoped, tag = 'scoped memory for tpu_custom_call.1']
    #allocation4 [shape = 's32[2]{0}', space=sflag, size = 0x8, scoped, tag = 'scoped memory for tpu_custom_call.1']
    #allocation5 [shape = 'u8[32768]{0}', space=vmem, size = 0x8000, scoped, tag = 'input window, operand 1, single buffered']
    #allocation6 [shape = 's32[1]{0}', space=sflag, size = 0x4, scoped, tag = 'scoped memory for tpu_custom_call.1']
    #allocation7 [shape = 'u8[65536]{0}', space=vmem, size = 0x10000, scoped, tag = 'output window, operand 0']
    %8 = vsyncpa [#allocation3], 0
    %s9 = scalar_lea.sflag [#allocation3], 1
    %10 = vsyncpa %s9, 0
    %11 = vsyncpa [#allocation6], 0
    %12 = vsyncpa [#allocation4], 0
    %s13 = scalar_lea.sflag [#allocation4], 1
    %14 = vsyncpa %s13, 0
    loop: start=0, step=1, limit=4
    $region2: #{tpu_custom_call.1} parent=1 // loop_pre_header
      _
    $region3: #{tpu_custom_call.1} parent=1 // loop_header
      %s16 = sphi 0, %s20
      %p17 = scmp.ge.s32.totalorder %s16, 4
      %s26 = sphi 0, %s28
      %s29 = sphi 0, %s26
      %s30 = sphi 0, %s29
      %s46 = sphi 0, %s30
      %s50 = sphi 0, %s50
      %s52 = sphi 0, %s50
      %s53 = sphi 0, %s52
      %s67 = sphi 0, %s53
      %s71 = sphi 0, %s71
      %s73 = sphi 0, %s71
      %s74 = sphi 0, %s73
      %s88 = sphi 0, %s74
      %s94 = sphi 0, %s96
      %s97 = sphi 0, %s94
      %s98 = sphi 0, %s97
      %s114 = sphi 0, %s98
    $region4: #{tpu_custom_call.1} parent=1 // loop_header_branch
      %19 = sbr.rel (%p17) target = $region8
    $region5: #{tpu_custom_call.1} parent=1 // loop_body
      %s21 = ssub.s32 %s16, 1
      %s22 = ssub.s32 %s16, 2
      %s23 = sadd.s32 %s16, 1
      %s24 = ssub.s32 %s16, %s23
      %p25 = scmp.eq.s32.totalorder %s24, 0
      %s27 = sadd.s32 %s26, 1
      %s28 = scalar_select %p25, %s26, %s27
      %p31 = pneg %p25
      %p32 = scmp.eq.s32.totalorder %s16, 1
      %p33 = por %p31, %p32
      %p34 = scmp.ne.s32.totalorder %s26, %s29
      %p35 = scmp.eq.s32.totalorder %s16, 0
      %p36 = por %p34, %p35
      %p37 = scmp.ne.s32.totalorder %s26, %s29
      %p38 = scmp.eq.s32.totalorder %s21, 1
      %p39 = por %p37, %p38
      %p40 = scmp.ne.s32.totalorder %s29, %s30
      %p41 = scmp.eq.s32.totalorder %s21, 0
      %p42 = por %p40, %p41
      %p43 = scmp.ne.s32.totalorder %s29, %s30
      %p44 = scmp.eq.s32.totalorder %s22, 1
      %p45 = por %p43, %p44
      %p47 = scmp.ne.s32.totalorder %s30, %s46
      %p48 = scmp.eq.s32.totalorder %s22, 0
      %p49 = por %p47, %p48
      %s51 = sadd.s32 %s50, 1
      %p54 = scmp.eq.s32.totalorder %s16, 1
      %p55 = scmp.ne.s32.totalorder %s50, %s52
      %p56 = scmp.eq.s32.totalorder %s16, 0
      %p57 = por %p55, %p56
      %p58 = scmp.ne.s32.totalorder %s50, %s52
      %p59 = scmp.eq.s32.totalorder %s21, 1
      %p60 = por %p58, %p59
      %p61 = scmp.ne.s32.totalorder %s52, %s53
      %p62 = scmp.eq.s32.totalorder %s21, 0
      %p63 = por %p61, %p62
      %p64 = scmp.ne.s32.totalorder %s52, %s53
      %p65 = scmp.eq.s32.totalorder %s22, 1
      %p66 = por %p64, %p65
      %p68 = scmp.ne.s32.totalorder %s53, %s67
      %p69 = scmp.eq.s32.totalorder %s22, 0
      %p70 = por %p68, %p69
      %s72 = sadd.s32 %s71, 1
      %p75 = scmp.eq.s32.totalorder %s16, 1
      %p76 = scmp.ne.s32.totalorder %s71, %s73
      %p77 = scmp.eq.s32.totalorder %s16, 0
      %p78 = por %p76, %p77
      %p79 = scmp.ne.s32.totalorder %s71, %s73
      %p80 = scmp.eq.s32.totalorder %s21, 1
      %p81 = por %p79, %p80
      %p82 = scmp.ne.s32.totalorder %s73, %s74
      %p83 = scmp.eq.s32.totalorder %s21, 0
      %p84 = por %p82, %p83
      %p85 = scmp.ne.s32.totalorder %s73, %s74
      %p86 = scmp.eq.s32.totalorder %s22, 1
      %p87 = por %p85, %p86
      %p89 = scmp.ne.s32.totalorder %s74, %s88
      %p90 = scmp.eq.s32.totalorder %s22, 0
      %p91 = por %p89, %p90
      %s92 = ssub.s32 %s16, %s23
      %p93 = scmp.eq.s32.totalorder %s92, 0
      %s95 = sadd.s32 %s94, 1
      %s96 = scalar_select %p93, %s94, %s95
      %p99 = pneg %p93
      %p100 = scmp.eq.s32.totalorder %s16, 1
      %p101 = por %p99, %p100
      %p102 = scmp.ne.s32.totalorder %s94, %s97
      %p103 = scmp.eq.s32.totalorder %s16, 0
      %p104 = por %p102, %p103
      %p105 = scmp.ne.s32.totalorder %s94, %s97
      %p106 = scmp.eq.s32.totalorder %s21, 1
      %p107 = por %p105, %p106
      %p108 = scmp.ne.s32.totalorder %s97, %s98
      %p109 = scmp.eq.s32.totalorder %s21, 0
      %p110 = por %p108, %p109
      %p111 = scmp.ne.s32.totalorder %s97, %s98
      %p112 = scmp.eq.s32.totalorder %s22, 1
      %p113 = por %p111, %p112
      %p115 = scmp.ne.s32.totalorder %s98, %s114
      %p116 = scmp.eq.s32.totalorder %s22, 0
      %p117 = por %p115, %p116
      %p118 = scmp.le.s32.totalorder 1, %s16
      %p119 = scmp.lt.s32.totalorder %s16, 3
      %p120 = pnand %p118, %p119
      %p121 = pneg %p120
      // Predicated region
      $region9: #{tpu_custom_call.1} parent=5 // pred_check
        _
      $region10: #{tpu_custom_call.1} parent=5 // pred_check_branch
        %123 = sbr.rel (%p120) target = $region12
      $region11: #{tpu_custom_call.1} parent=5 // pred_region
        %s124 = ssub.s32 %s16, 1
        // Predicated region
        $region13: #{tpu_custom_call.1} parent=11 // pred_check
          %p125 = pneg %p63
        $region14: #{tpu_custom_call.1} parent=11 // pred_check_branch
          %127 = sbr.rel (%p125) target = $region16
        $region15: #{tpu_custom_call.1} parent=11 // pred_region
          %s129 = ssub.s32 1024, 1024
          %130 = vsyncadd [#allocation6], %s129
          %s131 = sshll.u32 [#allocation5], 4
          %s132 = int_to_ptr.vmem [resolvable:$true] %s131
          %137 = dma.hbm_to_vmem [thread:$0]  %s1, 1024, %s132, [#allocation6], 64, 64, 4
        $region16: #{tpu_custom_call.1} parent=11 // pred_fallthru
          _
        // Predicated region
        $region17: #{tpu_custom_call.1} parent=11 // pred_check
          %p138 = pneg %p84
        $region18: #{tpu_custom_call.1} parent=11 // pred_check_branch
          %140 = sbr.rel (%p138) target = $region20
        $region19: #{tpu_custom_call.1} parent=11 // pred_region
          _
        $region20: #{tpu_custom_call.1} parent=11 // pred_fallthru
          _
      $region12: #{tpu_custom_call.1} parent=5 // pred_fallthru
        _
      %p141 = scmp.lt.s32.totalorder %s16, 2
      // Predicated region
      $region21: #{tpu_custom_call.1} parent=5 // pred_check
        %p142 = pneg %p141
      $region22: #{tpu_custom_call.1} parent=5 // pred_check_branch
        %144 = sbr.rel (%p142) target = $region24
      $region23: #{tpu_custom_call.1} parent=5 // pred_region
        // Predicated region
        $region25: #{tpu_custom_call.1} parent=23 // pred_check
          %p145 = pneg %p36
        $region26: #{tpu_custom_call.1} parent=23 // pred_check_branch
          %147 = sbr.rel (%p145) target = $region28
        $region27: #{tpu_custom_call.1} parent=23 // pred_region
          %s148 = sand.u32 %s26, 1
          %s149 = scalar_lea.sflag [#allocation3], %s148
          %s150 = sand.u32 %s26, 1
          %s151 = smul.addr %s150, 64
          %s152 = scalar_lea.vmem [#allocation2], %s151
          %s153 = smul.u32 8, %s16
          %s155 = ssub.s32 1024, 1024
          %156 = vsyncadd %s149, %s155
          %s157 = smul.addr %s153, 128
          %s158 = scalar_lea.hbm %s0, %s157
          %s159 = sshll.u32 %s152, 4
          %s160 = int_to_ptr.vmem [resolvable:$true] %s159
          %165 = dma.hbm_to_vmem [thread:$0]  %s158, 1024, %s160, %s149, 128, 128, 8
        $region28: #{tpu_custom_call.1} parent=23 // pred_fallthru
          _
      $region24: #{tpu_custom_call.1} parent=5 // pred_fallthru
        _
      %p166 = scmp.le.s32.totalorder 1, %s16
      %p167 = scmp.lt.s32.totalorder %s16, 3
      %p168 = pnand %p166, %p167
      %p169 = pneg %p168
      // Predicated region
      $region29: #{tpu_custom_call.1} parent=5 // pred_check
        _
      $region30: #{tpu_custom_call.1} parent=5 // pred_check_branch
        %171 = sbr.rel (%p168) target = $region32
      $region31: #{tpu_custom_call.1} parent=5 // pred_region
        %s172 = ssub.s32 %s16, 1
        %s173 = sand.u32 %s29, 1
        %s174 = scalar_lea.sflag [#allocation3], %s173
        %s175 = sand.u32 %s29, 1
        %s176 = smul.addr %s175, 64
        %s177 = scalar_lea.vmem [#allocation2], %s176
        // Predicated region
        $region33: #{tpu_custom_call.1} parent=31 // pred_check
          %p178 = pneg %p42
        $region34: #{tpu_custom_call.1} parent=31 // pred_check_branch
          %180 = sbr.rel (%p178) target = $region36
        $region35: #{tpu_custom_call.1} parent=31 // pred_region
          %181 = dma.done %s174, 1024
        $region36: #{tpu_custom_call.1} parent=31 // pred_fallthru
          _
        // Predicated region
        $region37: #{tpu_custom_call.1} parent=31 // pred_check
          %p182 = pneg %p63
        $region38: #{tpu_custom_call.1} parent=31 // pred_check_branch
          %184 = sbr.rel (%p182) target = $region40
        $region39: #{tpu_custom_call.1} parent=31 // pred_region
          %185 = dma.done [#allocation6], 1024
        $region40: #{tpu_custom_call.1} parent=31 // pred_fallthru
          _
        %s186 = sand.u32 %s29, 1
        %s187 = scalar_lea.sflag [#allocation3], %s186
        %s188 = sand.u32 %s29, 1
        %s189 = smul.addr %s188, 64
        %s190 = scalar_lea.vmem [#allocation2], %s189
        %p191 = pneg %p42
        %p192 = pneg %p39
        %p193 = pneg %p63
        %p194 = pneg %p60
        %p195 = pneg %p84
        %p196 = pneg %p81
        %p197 = pneg %p110
        %p198 = pneg %p107
        %s199 = sand.u32 %s97, 1
        %s200 = scalar_lea.sflag [#allocation4], %s199
        %s201 = sand.u32 %s97, 1
        %s202 = smul.addr %s201, 64
        %s203 = scalar_lea.vmem [#allocation7], %s202
        %s204 = smul.u32 8, %s21
        %s205 = smul.u32 8, %s21
        %v207 = vld [vmem:[%s177] sm:$0xff]
        %v208 = vld [vmem:[%s177 + $0x8] sm:$0xff]
        %v209 = vld [vmem:[%s177 + $0x10] sm:$0xff]
        %v210 = vld [vmem:[%s177 + $0x18] sm:$0xff]
        %v211 = vld [vmem:[%s177 + $0x20] sm:$0xff]
        %v212 = vld [vmem:[%s177 + $0x28] sm:$0xff]
        %v213 = vld [vmem:[%s177 + $0x30] sm:$0xff]
        %v214 = vld [vmem:[%s177 + $0x38] sm:$0xff]
        %v215 = vpack.c.bf16 %v208, %v207
        %v216 = vpack.c.bf16 %v210, %v209
        %v217 = vpack.c.bf16 %v212, %v211
        %v218 = vpack.c.bf16 %v214, %v213
        %v219 = vld [vmem:[#allocation5] sm:$0xf]
        %v220 = vld [vmem:[#allocation5 + $0x4] sm:$0xf]
        %v221 = vld [vmem:[#allocation5 + $0x8] sm:$0xf]
        %v222 = vld [vmem:[#allocation5 + $0xc] sm:$0xf]
        %v223 = vld [vmem:[#allocation5 + $0x10] sm:$0xf]
        %v224 = vld [vmem:[#allocation5 + $0x14] sm:$0xf]
        %v225 = vld [vmem:[#allocation5 + $0x18] sm:$0xf]
        %v226 = vld [vmem:[#allocation5 + $0x1c] sm:$0xf]
        %v227 = vld [vmem:[#allocation5 + $0x20] sm:$0xf]
        %v228 = vld [vmem:[#allocation5 + $0x24] sm:$0xf]
        %v229 = vld [vmem:[#allocation5 + $0x28] sm:$0xf]
        %v230 = vld [vmem:[#allocation5 + $0x2c] sm:$0xf]
        %v231 = vld [vmem:[#allocation5 + $0x30] sm:$0xf]
        %v232 = vld [vmem:[#allocation5 + $0x34] sm:$0xf]
        %v233 = vld [vmem:[#allocation5 + $0x38] sm:$0xf]
        %v234 = vld [vmem:[#allocation5 + $0x3c] sm:$0xf]
        %v235 = vld [vmem:[%s2] sm:$0x1]
        %v237 = vlaneseq
        %v238 = vshrl.u32 %v237, 7
        %v239 = vsub.s32 0, %v238
        %v240 = vrot.slane %v235, %v239
        %v258 = vunpack.c.l.b16 %v219
        %v259 = vunpack.c.l.b16 %v220
        %v260 = vunpack.c.l.b16 %v221
        %v261 = vunpack.c.l.b16 %v222
        %v262 = vunpack.c.l.b16 %v223
        %v263 = vunpack.c.l.b16 %v224
        %v264 = vunpack.c.l.b16 %v225
        %v265 = vunpack.c.l.b16 %v226
        %v266 = vunpack.c.l.b16 %v227
        %v267 = vunpack.c.l.b16 %v228
        %v268 = vunpack.c.l.b16 %v229
        %v269 = vunpack.c.l.b16 %v230
        %v270 = vunpack.c.l.b16 %v231
        %v271 = vunpack.c.l.b16 %v232
        %v272 = vunpack.c.l.b16 %v233
        %v273 = vunpack.c.l.b16 %v234
        %v274 = vpack.c.b16 %v259, %v258
        %v275 = vpack.c.b16 %v261, %v260
        %v276 = vpack.c.b16 %v263, %v262
        %v277 = vpack.c.b16 %v265, %v264
        %v278 = vpack.c.b16 %v267, %v266
        %v279 = vpack.c.b16 %v269, %v268
        %v280 = vpack.c.b16 %v271, %v270
        %v281 = vpack.c.b16 %v273, %v272
        %290 = vmatprep.subr.bf16.mxu0 0
        %291 = vmatpush1.bf16.msra.mxu0 %v274
        %292 = vmatprep.subr.bf16.mxu0 0
        %293 = vmatpush1.bf16.msra.mxu0 %v275
        %294 = vmatprep.subr.bf16.mxu0 0
        %295 = vmatpush1.bf16.msra.mxu0 %v276
        %296 = vmatprep.subr.bf16.mxu0 0
        %297 = vmatpush1.bf16.msra.mxu0 %v277
        %298 = vmatprep.subr.bf16.mxu0 0
        %299 = vmatpush1.bf16.msra.mxu0 %v278
        %300 = vmatprep.subr.bf16.mxu0 0
        %301 = vmatpush1.bf16.msra.mxu0 %v279
        %302 = vmatprep.subr.bf16.mxu0 0
        %303 = vmatpush1.bf16.msra.mxu0 %v280
        %304 = vmatprep.subr.bf16.mxu0 0
        %305 = vmatpush1.bf16.msra.mxu0 %v281
        %306 = vmatprep.subr.bf16.mxu0 0
        %307 = vmatpush1.bf16.msra.mxu0 0
        %308 = vmatprep.subr.bf16.mxu0 0
        %309 = vmatpush1.bf16.msra.mxu0 0
        %310 = vmatprep.subr.bf16.mxu0 0
        %311 = vmatpush1.bf16.msra.mxu0 0
        %312 = vmatprep.subr.bf16.mxu0 0
        %313 = vmatpush1.bf16.msra.mxu0 0
        %314 = vmatprep.subr.bf16.mxu0 0
        %315 = vmatpush1.bf16.msra.mxu0 0
        %316 = vmatprep.subr.bf16.mxu0 0
        %317 = vmatpush1.bf16.msra.mxu0 0
        %318 = vmatprep.subr.bf16.mxu0 0
        %319 = vmatpush1.bf16.msra.mxu0 0
        %320 = vmatprep.subr.bf16.mxu0 0
        %321 = vmatpush1.bf16.msra.mxu0 0
        %322 = vmatprep.mubr.bf16.mxu0 0
        %323 = vmatmul.mubr.bf16.gmra.mrb[0].mxu0 %v215
        %v324 = vpop.f32.mrb[0].mxu0
        %v325 = vadd.f32 %v240, %v324
        %v326 = vpop.f32.mrb[0].mxu0
        %v327 = vpop.f32.mrb[0].mxu0
        %v328 = vadd.f32 %v240, %v327
        %v329 = vpop.f32.mrb[0].mxu0
        %330 = vmatprep.mubr.bf16.mxu0 0
        %331 = vmatmul.mubr.bf16.gmra.mrb[0].mxu0 %v216
        %v332 = vpop.f32.mrb[0].mxu0
        %v333 = vadd.f32 %v240, %v332
        %v334 = vpop.f32.mrb[0].mxu0
        %v335 = vpop.f32.mrb[0].mxu0
        %v336 = vadd.f32 %v240, %v335
        %v337 = vpop.f32.mrb[0].mxu0
        %338 = vmatprep.mubr.bf16.mxu0 0
        %339 = vmatmul.mubr.bf16.gmra.mrb[0].mxu0 %v217
        %v340 = vpop.f32.mrb[0].mxu0
        %v341 = vadd.f32 %v240, %v340
        %v342 = vpop.f32.mrb[0].mxu0
        %v343 = vpop.f32.mrb[0].mxu0
        %v344 = vadd.f32 %v240, %v343
        %v345 = vpop.f32.mrb[0].mxu0
        %346 = vmatprep.mubr.bf16.mxu0 0
        %347 = vmatmul.mubr.bf16.gmra.mrb[0].mxu0 %v218
        %v348 = vpop.f32.mrb[0].mxu0
        %v349 = vadd.f32 %v240, %v348
        %v350 = vpop.f32.mrb[0].mxu0
        %v351 = vpop.f32.mrb[0].mxu0
        %v352 = vadd.f32 %v240, %v351
        %v353 = vpop.f32.mrb[0].mxu0
        %354 = vdwg.mxu0
        %355 = vst [vmem:[%s203] sm:$0xff] %v325
        %356 = vst [vmem:[%s203 + $0x8] sm:$0xff] %v328
        %357 = vst [vmem:[%s203 + $0x10] sm:$0xff] %v333
        %358 = vst [vmem:[%s203 + $0x18] sm:$0xff] %v336
        %359 = vst [vmem:[%s203 + $0x20] sm:$0xff] %v341
        %360 = vst [vmem:[%s203 + $0x28] sm:$0xff] %v344
        %361 = vst [vmem:[%s203 + $0x30] sm:$0xff] %v349
        %362 = vst [vmem:[%s203 + $0x38] sm:$0xff] %v352
        %s363 = sand.u32 %s97, 1
        %s364 = scalar_lea.sflag [#allocation4], %s363
        %s365 = sand.u32 %s97, 1
        %s366 = smul.addr %s365, 64
        %s367 = scalar_lea.vmem [#allocation7], %s366
        // Predicated region
        $region41: #{tpu_custom_call.1} parent=31 // pred_check
          %p368 = pneg %p107
        $region42: #{tpu_custom_call.1} parent=31 // pred_check_branch
          %370 = sbr.rel (%p368) target = $region44
        $region43: #{tpu_custom_call.1} parent=31 // pred_region
          %s371 = smul.u32 8, %s21
          %s373 = ssub.s32 1024, 1024
          %374 = vsyncadd %s364, %s373
          %s375 = smul.addr %s371, 128
          %s376 = scalar_lea.hbm %s3, %s375
          %s377 = sshll.u32 %s367, 4
          %s378 = int_to_ptr.vmem [resolvable:$true] %s377
          %383 = dma.vmem_to_hbm [thread:$0]  %s378, 1024, %s376, %s364, 128, 128, 8
        $region44: #{tpu_custom_call.1} parent=31 // pred_fallthru
          _
      $region32: #{tpu_custom_call.1} parent=5 // pred_fallthru
        _
      %p384 = scmp.le.s32.totalorder 2, %s16
      // Predicated region
      $region45: #{tpu_custom_call.1} parent=5 // pred_check
        %p385 = pneg %p384
      $region46: #{tpu_custom_call.1} parent=5 // pred_check_branch
        %387 = sbr.rel (%p385) target = $region48
      $region47: #{tpu_custom_call.1} parent=5 // pred_region
        %s388 = ssub.s32 %s16, 2
        // Predicated region
        $region49: #{tpu_custom_call.1} parent=47 // pred_check
          %p389 = pneg %p113
        $region50: #{tpu_custom_call.1} parent=47 // pred_check_branch
          %391 = sbr.rel (%p389) target = $region52
        $region51: #{tpu_custom_call.1} parent=47 // pred_region
          %s392 = sand.u32 %s98, 1
          %s393 = scalar_lea.sflag [#allocation4], %s392
          %s394 = sand.u32 %s98, 1
          %s395 = smul.addr %s394, 64
          %s396 = scalar_lea.vmem [#allocation7], %s395
          %397 = dma.done %s393, 1024
        $region52: #{tpu_custom_call.1} parent=47 // pred_fallthru
          _
      $region48: #{tpu_custom_call.1} parent=5 // pred_fallthru
        _
    $region6: #{tpu_custom_call.1} parent=1 // loop_footer
      %s20 = sadd.s32 1, %s16
    $region7: #{tpu_custom_call.1} parent=1 // loop_footer_branch
      %15 = sbr.rel target = $region3
    $region8: #{tpu_custom_call.1} parent=1 // loop_exit
      _
    %398 = vsyncpa [#allocation3], 1
    %s399 = scalar_lea.sflag [#allocation3], 1
    %400 = vsyncpa %s399, 1
    %401 = vsyncpa [#allocation6], 1
    %402 = vsyncpa [#allocation4], 1
    %s403 = scalar_lea.sflag [#allocation4], 1
    %404 = vsyncpa %s403, 1

</llo_original>
